<compile_context>
chip_gen: v6e
topology: v6e:2x2x1
jax: 0.10.0
libtpu: 0.0.40
codegen_flags: <defaults>
</compile_context>

<pallas_src>
import numpy as np
import jax
import jax.numpy as jnp
from jax.experimental import pallas as pl
from jax.experimental.pallas import tpu as pltpu


def _round_up(x, m):
    return ((x + m - 1) // m) * m


# ----------------------------------------------------------------------------
# Kernel 1: one-shot prep of mt_hid^T (H, T_pad)
#   mt_hid^T = w0 * trend^T + w1 * (embA^T @ sinx + embB^T @ cosx)
# ----------------------------------------------------------------------------
def mt_prep_kernel(w_ref,        # SMEM (2,)        softmax(param)
                   trend_t_ref,  # VMEM (H, T_pad)  trend embeddings, transposed
                   sinx_ref,     # VMEM (SFp, T_pad) sin basis (flattened i,j rows)
                   cosx_ref,     # VMEM (SFp, T_pad) cos basis
                   emba_t_ref,   # VMEM (H, SFp)    seasonal emb rows (sin), transposed
                   embb_t_ref,   # VMEM (H, SFp)    seasonal emb rows (cos), transposed
                   mt_t_ref):    # VMEM (H, T_pad)  output
    season_t = jnp.dot(emba_t_ref[...], sinx_ref[...],
                       preferred_element_type=jnp.float32)
    season_t = season_t + jnp.dot(embb_t_ref[...], cosx_ref[...],
                                  preferred_element_type=jnp.float32)
    mt_t_ref[...] = w_ref[0] * trend_t_ref[...] + w_ref[1] * season_t


# ----------------------------------------------------------------------------
# Kernel 2: tiled GEMM + broadcast bias adds
#   out[b, t] = sum_h ms[b, h] * mt_hid^T[h, t] + bs_sum[b] + bt_sum[t]
# ----------------------------------------------------------------------------
def tider_gemm_kernel(ms_ref,    # VMEM (TM, H)
                      mt_t_ref,  # VMEM (H, TN)
                      bs_ref,    # VMEM (TM, 1)   per-road bias row-sum
                      bt_ref,    # VMEM (1, TN)   per-time bias row-sum
                      out_ref):  # VMEM (TM, TN)
    core = jnp.dot(ms_ref[...], mt_t_ref[...],
                   preferred_element_type=jnp.float32)
    out_ref[...] = core + bs_ref[...] + bt_ref[...]


# ----------------------------------------------------------------------------
# Wrapper: equivalent of TIDER.forward(roads) -> (batch, T)
# ----------------------------------------------------------------------------
def tider_forward_pallas(params, roads, cfg):
    B = roads.shape[0]
    T = int(cfg["t"])
    H = int(cfg["hid_size"])

    # ---- gathers / small reshapes (glue) ----
    s_emb = params["s_embeddings"][roads].astype(jnp.float32)           # (B, H)
    bias_s = params["s_embeddings_bias"][roads].astype(jnp.float32)     # (B, U)
    trend = params["t_embeddings_trend"].astype(jnp.float32)            # (T, H)
    bias_t = params["bias_t"].astype(jnp.float32)                       # (T, Bd)
    emb_a = params["t_embeddings_season"][cfg["idx_a"]].astype(jnp.float32)  # (SF, H)
    emb_b = params["t_embeddings_season"][cfg["idx_b"]].astype(jnp.float32)  # (SF, H)
    # NOTE: sinx/cosx flatten order (k = i*topk_freq + j) must match idx_a/idx_b
    # construction order -- both are built with the same (i, j) loop nest below.
    sinx = cfg["sinx"].reshape(-1, T).astype(jnp.float32)                # (SF, T)
    cosx = cfg["cosx"].reshape(-1, T).astype(jnp.float32)                # (SF, T)
    w = jax.nn.softmax(params["param"], axis=-1).astype(jnp.float32)     # (2,)

    SF = sinx.shape[0]
    SF_pad = _round_up(max(SF, 8), 8)

    # ---- tile plan: lane-dense T tiles (multiple of 128), sublane-aligned B ----
    TM = min(256, _round_up(B, 8))
    TN = min(512, _round_up(T, 128))
    B_pad = _round_up(B, TM)
    T_pad = _round_up(T, TN)

    # ---- pad operands (zeros; mathematically exact, sliced off at the end) ----
    trend_t = jnp.pad(trend.T, ((0, 0), (0, T_pad - T)))                 # (H, T_pad)
    sinx_p = jnp.pad(sinx, ((0, SF_pad - SF), (0, T_pad - T)))           # (SFp, T_pad)
    cosx_p = jnp.pad(cosx, ((0, SF_pad - SF), (0, T_pad - T)))           # (SFp, T_pad)
    emba_t = jnp.pad(emb_a.T, ((0, 0), (0, SF_pad - SF)))                # (H, SFp)
    embb_t = jnp.pad(emb_b.T, ((0, 0), (0, SF_pad - SF)))                # (H, SFp)

    # ---- prep kernel: mt_hid^T (H, T_pad), computed once ----
    vmem = pltpu.MemorySpace.VMEM
    mt_t = pl.pallas_call(
        mt_prep_kernel,
        out_shape=jax.ShapeDtypeStruct((H, T_pad), jnp.float32),
        in_specs=[
            pl.BlockSpec(memory_space=pltpu.MemorySpace.SMEM),   # w
            pl.BlockSpec(memory_space=vmem),                     # trend_t
            pl.BlockSpec(memory_space=vmem),                     # sinx
            pl.BlockSpec(memory_space=vmem),                     # cosx
            pl.BlockSpec(memory_space=vmem),                     # embA^T
            pl.BlockSpec(memory_space=vmem),                     # embB^T
        ],
        out_specs=pl.BlockSpec(memory_space=vmem),
    )(w, trend_t, sinx_p, cosx_p, emba_t, embb_t)

    # ---- bias row-sums (replace the ones-vector matmuls of the reference) ----
    bs_sum = jnp.pad(jnp.sum(bias_s, axis=1, keepdims=True),
                     ((0, B_pad - B), (0, 0)))                           # (B_pad, 1)
    bt_sum = jnp.pad(jnp.sum(bias_t, axis=1)[None, :],
                     ((0, 0), (0, T_pad - T)))                           # (1, T_pad)
    ms_p = jnp.pad(s_emb, ((0, B_pad - B), (0, 0)))                      # (B_pad, H)

    # ---- main tiled GEMM over the (B, T) grid ----
    out = pl.pallas_call(
        tider_gemm_kernel,
        out_shape=jax.ShapeDtypeStruct((B_pad, T_pad), jnp.float32),
        grid=(B_pad // TM, T_pad // TN),
        in_specs=[
            pl.BlockSpec((TM, H), lambda i, j: (i, 0)),    # ms tile
            pl.BlockSpec((H, TN), lambda i, j: (0, j)),    # mt_hid^T tile
            pl.BlockSpec((TM, 1), lambda i, j: (i, 0)),    # per-road bias sum
            pl.BlockSpec((1, TN), lambda i, j: (0, j)),    # per-time bias sum
        ],
        out_specs=pl.BlockSpec((TM, TN), lambda i, j: (i, j)),
        compiler_params=pltpu.CompilerParams(
            dimension_semantics=("parallel", "parallel")),
    )(ms_p, mt_t, bs_sum, bt_sum)

    return out[:B, :T]


# ----------------------------------------------------------------------------
# Pure-JAX reference (mirrors the PyTorch module op-for-op)
# ----------------------------------------------------------------------------
def tider_forward_ref(params, roads, cfg):
    B = roads.shape[0]
    T = cfg["t"]
    H = cfg["hid_size"]
    Bd = cfg["bias_dim"]
    U = cfg["u_bias_dim"]

    # getu
    ms = params["s_embeddings"][roads]
    ones_s = jnp.ones((B, Bd), jnp.float32)
    bias_s = params["s_embeddings_bias"][roads]
    ms = jnp.concatenate([ms, ones_s, bias_s], axis=1)

    # getv
    mt_trend = params["t_embeddings_trend"]
    ret = jnp.zeros((T, H), jnp.float32)
    for i in range(cfg["season_num"]):
        for j in range(cfg["topk_freq"]):
            sin_t = cfg["sinx"][i, j]
            cos_t = cfg["cosx"][i, j]
            emb_a = params["t_embeddings_season"][i * 2 + j * cfg["season_num"]]
            emb_b = params["t_embeddings_season"][i * 2 + 1 + j * cfg["season_num"]]
            ret = ret + jnp.outer(sin_t, emb_a)
            ret = ret + jnp.outer(cos_t, emb_b)
    mt_season = ret
    sm = jax.nn.softmax(params["param"], axis=-1)
    mt = sm[0] * mt_trend + sm[1] * mt_season
    mt_bias = params["bias_t"]
    ones_v = jnp.ones((T, U), jnp.float32)
    mt = jnp.concatenate([mt, mt_bias, ones_v], axis=1)

    return ms @ mt.T


# ----------------------------------------------------------------------------
# Main
# ----------------------------------------------------------------------------
if __name__ == "__main__":
    # Small configuration consistent with TIDER.__init__
    n = 8               # number of road links
    t = 16              # number of time steps
    hid_size = 32
    bias_dim = 8
    u_bias_dim = 4
    season_num = 2
    topk_freq = 2
    seasonality = [7.0, 12.0]          # len == topk_freq
    batch = 8

    key = jax.random.PRNGKey(0)
    k1, k2, k3, k4, k5, k6 = jax.random.split(key, 6)

    params = {
        # nn.Embedding default init ~ N(0, 1)
        "s_embeddings":        jax.random.normal(k1, (n, hid_size), jnp.float32),
        "t_embeddings_trend":  jax.random.normal(k2, (t, hid_size), jnp.float32),
        "t_embeddings_season": jax.random.normal(
            k3, (2 * season_num * topk_freq, hid_size), jnp.float32),
        "s_embeddings_bias":   jax.random.normal(k4, (n, u_bias_dim), jnp.float32),
        "bias_t":              jax.random.normal(k5, (t, bias_dim), jnp.float32),
        "param":               jnp.zeros((2,), jnp.float32),
    }
    # TODO(synk): self.modlst (lag Linear layers) and self.F_ada are only used
    # in bias_loss / unused paths, not in forward(); they are not materialized.

    # Precompute sin/cos bases exactly as in __init__ (same (i, j) loop nest
    # as the idx_a / idx_b construction below -- keep them together).
    times = np.arange(t, dtype=np.float32)
    sinx = np.zeros((season_num, topk_freq, t), dtype=np.float32)
    cosx = np.zeros((season_num, topk_freq, t), dtype=np.float32)
    for i in range(season_num):
        for j in range(topk_freq):
            sinx[i, j, :] = np.sin(i * 2 * np.pi / seasonality[j] * times)
            cosx[i, j, :] = np.cos(i * 2 * np.pi / seasonality[j] * times)

    idx_a = np.array([i * 2 + j * season_num
                      for i in range(season_num) for j in range(topk_freq)],
                     dtype=np.int32)
    idx_b = np.array([i * 2 + 1 + j * season_num
                      for i in range(season_num) for j in range(topk_freq)],
                     dtype=np.int32)
    assert idx_a.max() < 2 * season_num * topk_freq
    assert idx_b.max() < 2 * season_num * topk_freq

    cfg = {
        "t": t, "hid_size": hid_size, "bias_dim": bias_dim,
        "u_bias_dim": u_bias_dim, "season_num": season_num,
        "topk_freq": topk_freq,
        "sinx": jnp.asarray(sinx), "cosx": jnp.asarray(cosx),
        "idx_a": jnp.asarray(idx_a), "idx_b": jnp.asarray(idx_b),
    }

    roads = jax.random.randint(k6, (batch,), 0, n, dtype=jnp.int32)

    out = tider_forward_pallas(params, roads, cfg)
    out = jax.block_until_ready(out)

    ref = tider_forward_ref(params, roads, cfg)
    np.testing.assert_allclose(np.asarray(out), np.asarray(ref),
                               rtol=1e-5, atol=1e-5)

    print("KERNEL_OK")
</pallas_src>

<mosaic_0001>
module attributes {stable_mosaic.version = 11 : i64} {
  func.func @mt_prep_kernel(%arg0: memref<2xf32, #tpu.memory_space<smem>>, %arg1: memref<32x128xf32, #tpu.memory_space<vmem>>, %arg2: memref<8x128xf32, #tpu.memory_space<vmem>>, %arg3: memref<8x128xf32, #tpu.memory_space<vmem>>, %arg4: memref<32x8xf32, #tpu.memory_space<vmem>>, %arg5: memref<32x8xf32, #tpu.memory_space<vmem>>, %arg6: memref<32x128xf32, #tpu.memory_space<vmem>>) attributes {dimension_semantics = [], scalar_prefetch = 0 : i64, scratch_operands = 0 : i64, tpu.core_type = #tpu.core_type<tc>} {
    %c0 = arith.constant 0 : index
    %c0_0 = arith.constant 0 : index
    %0 = vector.load %arg4[%c0, %c0_0] : memref<32x8xf32, #tpu.memory_space<vmem>>, vector<32x8xf32>
    %c0_1 = arith.constant 0 : index
    %c0_2 = arith.constant 0 : index
    %1 = vector.load %arg2[%c0_1, %c0_2] : memref<8x128xf32, #tpu.memory_space<vmem>>, vector<8x128xf32>
    %cst = arith.constant dense<0.000000e+00> : vector<32x128xf32>
    %2 = tpu.matmul %0, %1, %cst {dimension_numbers = #tpu.dot_dimension_numbers<[1], [0], [0], [1], [0, 0, 1, 1], [], []>} : vector<32x8xf32>, vector<8x128xf32>, vector<32x128xf32> -> vector<32x128xf32>
    %c0_3 = arith.constant 0 : index
    %c0_4 = arith.constant 0 : index
    %3 = vector.load %arg5[%c0_3, %c0_4] : memref<32x8xf32, #tpu.memory_space<vmem>>, vector<32x8xf32>
    %c0_5 = arith.constant 0 : index
    %c0_6 = arith.constant 0 : index
    %4 = vector.load %arg3[%c0_5, %c0_6] : memref<8x128xf32, #tpu.memory_space<vmem>>, vector<8x128xf32>
    %cst_7 = arith.constant dense<0.000000e+00> : vector<32x128xf32>
    %5 = tpu.matmul %3, %4, %cst_7 {dimension_numbers = #tpu.dot_dimension_numbers<[1], [0], [0], [1], [0, 0, 1, 1], [], []>} : vector<32x8xf32>, vector<8x128xf32>, vector<32x128xf32> -> vector<32x128xf32>
    %6 = arith.addf %2, %5 : vector<32x128xf32>
    %c0_8 = arith.constant 0 : index
    %7 = memref.load %arg0[%c0_8] : memref<2xf32, #tpu.memory_space<smem>>
    %c0_9 = arith.constant 0 : index
    %c0_10 = arith.constant 0 : index
    %8 = vector.load %arg1[%c0_9, %c0_10] : memref<32x128xf32, #tpu.memory_space<vmem>>, vector<32x128xf32>
    %9 = vector.broadcast %7 : f32 to vector<32x128xf32>
    %10 = arith.mulf %9, %8 : vector<32x128xf32>
    %c1 = arith.constant 1 : index
    %11 = memref.load %arg0[%c1] : memref<2xf32, #tpu.memory_space<smem>>
    %12 = vector.broadcast %11 : f32 to vector<32x128xf32>
    %13 = arith.mulf %12, %6 : vector<32x128xf32>
    %14 = arith.addf %10, %13 : vector<32x128xf32>
    %c0_11 = arith.constant 0 : index
    %c0_12 = arith.constant 0 : index
    %15 = vector.load %arg6[%c0_11, %c0_12] : memref<32x128xf32, #tpu.memory_space<vmem>>, vector<32x128xf32>
    tpu.vector_store %arg6[%c0_11, %c0_12], %14 {strides = array<i32>} : memref<32x128xf32, #tpu.memory_space<vmem>>, vector<32x128xf32>,
    return
  }
}

</mosaic_0001>

<llo_original>
// kernel: tpu_custom_call.1
$region0: #{tpu_custom_call.1}
  #allocation0 [shape = 'u32[]', space=smem, size = 0x4, offset = 0x4, fixed_abs, tag = 'smem constant byte address 0x4 - core index']
  #allocation1 [shape = 'u32[144,128]{1,0:T(1,128)}', space=vmem, size = 0x12000, scoped, tag = 'internal scratch']
  %s0 = inlined_call_operand.vmem [shape: f32[2], index: 0, kind: input, shape index: {}]
  %s1 = inlined_call_operand.vmem [shape: f32[32,128], index: 1, kind: input, shape index: {}]
  %s2 = inlined_call_operand.vmem [shape: f32[8,128], index: 2, kind: input, shape index: {}]
  %s3 = inlined_call_operand.vmem [shape: f32[8,128], index: 3, kind: input, shape index: {}]
  %s4 = inlined_call_operand.vmem [shape: f32[32,8], index: 4, kind: input, shape index: {}]
  %s5 = inlined_call_operand.vmem [shape: f32[32,8], index: 5, kind: input, shape index: {}]
  %s6 = inlined_call_operand.hbm [shape: f32[32,128], index: 6, kind: output, shape index: {}]
  %s7 = sld [smem:[#allocation0]]
  $region38: #{tpu_custom_call.1} parent=0
    _
  %s9 = ssub.s32 1, %s7
  %s10 = scalar_select 0, %s9, %s7
  $region1: #{tpu_custom_call.1} parent=0
    #allocation2 [shape = 'u8[512]{0}', space=smem, size = 0x200, scoped, tag = 'input window, operand 0, single buffered']
    #allocation3 [shape = 's32[1]{0}', space=sflag, size = 0x4, scoped, tag = 'scoped memory for tpu_custom_call.1']
    #allocation4 [shape = 's32[1]{0}', space=sflag, size = 0x4, scoped, tag = 'scoped memory for tpu_custom_call.1']
    #allocation5 [shape = 'u8[16384]{0}', space=vmem, size = 0x4000, scoped, tag = 'output window, operand 0, single buffered']
    %11 = vsyncpa [#allocation4], 0
    %12 = vsyncpa [#allocation3], 0
    // Predicated region
    $region2: #{tpu_custom_call.1} parent=1 // pred_check
      _
    $region3: #{tpu_custom_call.1} parent=1 // pred_check_branch
      %14 = sbr.rel (0) target = $region5
    $region4: #{tpu_custom_call.1} parent=1 // pred_region
      %s16 = ssub.s32 16, 16
      %17 = vsyncadd [#allocation4], %s16
      %s19 = sshll.u32 %s0, 4
      %s20 = int_to_ptr.vmem [resolvable:$true] %s19
      %22 = dma.vmem_to_smem %s20, 16, [#allocation2], [#allocation4]
    $region5: #{tpu_custom_call.1} parent=1 // pred_fallthru
      _
    // Predicated region
    $region6: #{tpu_custom_call.1} parent=1 // pred_check
      _
    $region7: #{tpu_custom_call.1} parent=1 // pred_check_branch
      %24 = sbr.rel (0) target = $region9
    $region8: #{tpu_custom_call.1} parent=1 // pred_region
      _
    $region9: #{tpu_custom_call.1} parent=1 // pred_fallthru
      _
    // Predicated region
    $region10: #{tpu_custom_call.1} parent=1 // pred_check
      _
    $region11: #{tpu_custom_call.1} parent=1 // pred_check_branch
      %26 = sbr.rel (0) target = $region13
    $region12: #{tpu_custom_call.1} parent=1 // pred_region
      _
    $region13: #{tpu_custom_call.1} parent=1 // pred_fallthru
      _
    // Predicated region
    $region14: #{tpu_custom_call.1} parent=1 // pred_check
      _
    $region15: #{tpu_custom_call.1} parent=1 // pred_check_branch
      %28 = sbr.rel (0) target = $region17
    $region16: #{tpu_custom_call.1} parent=1 // pred_region
      _
    $region17: #{tpu_custom_call.1} parent=1 // pred_fallthru
      _
    // Predicated region
    $region18: #{tpu_custom_call.1} parent=1 // pred_check
      _
    $region19: #{tpu_custom_call.1} parent=1 // pred_check_branch
      %30 = sbr.rel (0) target = $region21
    $region20: #{tpu_custom_call.1} parent=1 // pred_region
      _
    $region21: #{tpu_custom_call.1} parent=1 // pred_fallthru
      _
    // Predicated region
    $region22: #{tpu_custom_call.1} parent=1 // pred_check
      _
    $region23: #{tpu_custom_call.1} parent=1 // pred_check_branch
      %32 = sbr.rel (0) target = $region25
    $region24: #{tpu_custom_call.1} parent=1 // pred_region
      _
    $region25: #{tpu_custom_call.1} parent=1 // pred_fallthru
      _
    // Predicated region
    $region26: #{tpu_custom_call.1} parent=1 // pred_check
      _
    $region27: #{tpu_custom_call.1} parent=1 // pred_check_branch
      %34 = sbr.rel (0) target = $region29
    $region28: #{tpu_custom_call.1} parent=1 // pred_region
      %35 = dma.done [#allocation4], 16
    $region29: #{tpu_custom_call.1} parent=1 // pred_fallthru
      _
    %36 = sfence
    %v37 = vld [vmem:[%s4] sm:$0xff]
    %v38 = vld [vmem:[%s4 + $0x8] sm:$0xff]
    %v39 = vld [vmem:[%s4 + $0x10] sm:$0xff]
    %v40 = vld [vmem:[%s4 + $0x18] sm:$0xff]
    %v41 = vld [vmem:[%s2] sm:$0xff]
    %v42 = vld [vmem:[%s5] sm:$0xff]
    %v43 = vld [vmem:[%s5 + $0x8] sm:$0xff]
    %v44 = vld [vmem:[%s5 + $0x10] sm:$0xff]
    %v45 = vld [vmem:[%s5 + $0x18] sm:$0xff]
    %v46 = vld [vmem:[%s3] sm:$0xff]
    %vm47 = vcmask 64512
    %v49 = vsel %vm47, %v42, 0
    %v52 = vsel %vm47, %v43, 0
    %v55 = vsel %vm47, %v44, 0
    %v58 = vsel %vm47, %v45, 0
    %60 = vmatprep.subr.mxu0 0.0
    %61 = vmatpush1.msra.mxu0 0.0
    %62 = vmatprep.subr.mxu0 0.0
    %63 = vmatpush1.msra.mxu0 0.0
    %64 = vmatprep.subr.mxu0 0.0
    %65 = vmatpush1.msra.mxu0 0.0
    %66 = vmatprep.subr.mxu0 0.0
    %67 = vmatpush1.msra.mxu0 0.0
    %68 = vmatprep.subr.mxu0 0.0
    %69 = vmatpush1.msra.mxu0 0.0
    %70 = vmatprep.subr.mxu0 0.0
    %71 = vmatpush1.msra.mxu0 0.0
    %72 = vmatprep.subr.mxu0 0.0
    %73 = vmatpush1.msra.mxu0 0.0
    %74 = vmatprep.subr.mxu0 0.0
    %75 = vmatpush1.msra.mxu0 0.0
    %76 = vmatprep.subr.mxu0 0.0
    %77 = vmatpush1.msra.mxu0 0.0
    %78 = vmatprep.subr.mxu0 0.0
    %79 = vmatpush1.msra.mxu0 0.0
    %80 = vmatprep.subr.mxu0 0.0
    %81 = vmatpush1.msra.mxu0 0.0
    %82 = vmatprep.subr.mxu0 0.0
    %83 = vmatpush1.msra.mxu0 0.0
    %84 = vmatprep.subr.mxu0 0.0
    %85 = vmatpush1.msra.mxu0 0.0
    %86 = vmatprep.subr.mxu0 0.0
    %87 = vmatpush1.msra.mxu0 0.0
    %88 = vmatprep.subr.mxu0 0.0
    %89 = vmatpush1.msra.mxu0 0.0
    %90 = vmatprep.subr.mxu0 0.0
    %91 = vmatpush1.msra.mxu0 %v46
    %92 = vmatprep.subr.mxu0 0.0
    %93 = vmatpush2.msra.mxu0 0.0
    %94 = vmatprep.subr.mxu0 0.0
    %95 = vmatpush2.msra.mxu0 0.0
    %96 = vmatprep.subr.mxu0 0.0
    %97 = vmatpush2.msra.mxu0 0.0
    %98 = vmatprep.subr.mxu0 0.0
    %99 = vmatpush2.msra.mxu0 0.0
    %100 = vmatprep.subr.mxu0 0.0
    %101 = vmatpush2.msra.mxu0 0.0
    %102 = vmatprep.subr.mxu0 0.0
    %103 = vmatpush2.msra.mxu0 0.0
    %104 = vmatprep.subr.mxu0 0.0
    %105 = vmatpush2.msra.mxu0 0.0
    %106 = vmatprep.subr.mxu0 0.0
    %107 = vmatpush2.msra.mxu0 0.0
    %108 = vmatprep.subr.mxu0 0.0
    %109 = vmatpush2.msra.mxu0 0.0
    %110 = vmatprep.subr.mxu0 0.0
    %111 = vmatpush2.msra.mxu0 0.0
    %112 = vmatprep.subr.mxu0 0.0
    %113 = vmatpush2.msra.mxu0 0.0
    %114 = vmatprep.subr.mxu0 0.0
    %115 = vmatpush2.msra.mxu0 0.0
    %116 = vmatprep.subr.mxu0 0.0
    %117 = vmatpush2.msra.mxu0 0.0
    %118 = vmatprep.subr.mxu0 0.0
    %119 = vmatpush2.msra.mxu0 0.0
    %120 = vmatprep.subr.mxu0 0.0
    %121 = vmatpush2.msra.mxu0 0.0
    %122 = vmatprep.subr.mxu0 0.0
    %123 = vmatpush2.msra.mxu0 0.0
    %124 = vmatprep.mubr.f32.mxu0 0.0
    %125 = vmatmul.mubr.f32.gmra.mxu0 %v49
    %v126 = vpop.f32.mrf.mxu0
    %v127 = vadd.f32 0.0, %v126
    %v128 = vpop.f32.mrf.mxu0
    %129 = vmatprep.mubr.f32.mxu0 0.0
    %130 = vmatmul.mubr.f32.gmra.mxu0 %v52
    %v131 = vpop.f32.mrf.mxu0
    %v132 = vadd.f32 0.0, %v131
    %v133 = vpop.f32.mrf.mxu0
    %134 = vmatprep.mubr.f32.mxu0 0.0
    %135 = vmatmul.mubr.f32.gmra.mxu0 %v55
    %v136 = vpop.f32.mrf.mxu0
    %v137 = vadd.f32 0.0, %v136
    %v138 = vpop.f32.mrf.mxu0
    %139 = vmatprep.mubr.f32.mxu0 0.0
    %140 = vmatmul.mubr.f32.gmra.mxu0 %v58
    %v141 = vpop.f32.mrf.mxu0
    %v142 = vadd.f32 0.0, %v141
    %v143 = vpop.f32.mrf.mxu0
    %144 = vdwg.mxu0
    %v146 = vsel %vm47, %v37, 0
    %v149 = vsel %vm47, %v38, 0
    %v152 = vsel %vm47, %v39, 0
    %v155 = vsel %vm47, %v40, 0
    %157 = vmatprep.subr.mxu0 0.0
    %158 = vmatpush1.msra.mxu0 0.0
    %159 = vmatprep.subr.mxu0 0.0
    %160 = vmatpush1.msra.mxu0 0.0
    %161 = vmatprep.subr.mxu0 0.0
    %162 = vmatpush1.msra.mxu0 0.0
    %163 = vmatprep.subr.mxu0 0.0
    %164 = vmatpush1.msra.mxu0 0.0
    %165 = vmatprep.subr.mxu0 0.0
    %166 = vmatpush1.msra.mxu0 0.0
    %167 = vmatprep.subr.mxu0 0.0
    %168 = vmatpush1.msra.mxu0 0.0
    %169 = vmatprep.subr.mxu0 0.0
    %170 = vmatpush1.msra.mxu0 0.0
    %171 = vmatprep.subr.mxu0 0.0
    %172 = vmatpush1.msra.mxu0 0.0
    %173 = vmatprep.subr.mxu0 0.0
    %174 = vmatpush1.msra.mxu0 0.0
    %175 = vmatprep.subr.mxu0 0.0
    %176 = vmatpush1.msra.mxu0 0.0
    %177 = vmatprep.subr.mxu0 0.0
    %178 = vmatpush1.msra.mxu0 0.0
    %179 = vmatprep.subr.mxu0 0.0
    %180 = vmatpush1.msra.mxu0 0.0
    %181 = vmatprep.subr.mxu0 0.0
    %182 = vmatpush1.msra.mxu0 0.0
    %183 = vmatprep.subr.mxu0 0.0
    %184 = vmatpush1.msra.mxu0 0.0
    %185 = vmatprep.subr.mxu0 0.0
    %186 = vmatpush1.msra.mxu0 0.0
    %187 = vmatprep.subr.mxu0 0.0
    %188 = vmatpush1.msra.mxu0 %v41
    %189 = vmatprep.subr.mxu0 0.0
    %190 = vmatpush2.msra.mxu0 0.0
    %191 = vmatprep.subr.mxu0 0.0
    %192 = vmatpush2.msra.mxu0 0.0
    %193 = vmatprep.subr.mxu0 0.0
    %194 = vmatpush2.msra.mxu0 0.0
    %195 = vmatprep.subr.mxu0 0.0
    %196 = vmatpush2.msra.mxu0 0.0
    %197 = vmatprep.subr.mxu0 0.0
    %198 = vmatpush2.msra.mxu0 0.0
    %199 = vmatprep.subr.mxu0 0.0
    %200 = vmatpush2.msra.mxu0 0.0
    %201 = vmatprep.subr.mxu0 0.0
    %202 = vmatpush2.msra.mxu0 0.0
    %203 = vmatprep.subr.mxu0 0.0
    %204 = vmatpush2.msra.mxu0 0.0
    %205 = vmatprep.subr.mxu0 0.0
    %206 = vmatpush2.msra.mxu0 0.0
    %207 = vmatprep.subr.mxu0 0.0
    %208 = vmatpush2.msra.mxu0 0.0
    %209 = vmatprep.subr.mxu0 0.0
    %210 = vmatpush2.msra.mxu0 0.0
    %211 = vmatprep.subr.mxu0 0.0
    %212 = vmatpush2.msra.mxu0 0.0
    %213 = vmatprep.subr.mxu0 0.0
    %214 = vmatpush2.msra.mxu0 0.0
    %215 = vmatprep.subr.mxu0 0.0
    %216 = vmatpush2.msra.mxu0 0.0
    %217 = vmatprep.subr.mxu0 0.0
    %218 = vmatpush2.msra.mxu0 0.0
    %219 = vmatprep.subr.mxu0 0.0
    %220 = vmatpush2.msra.mxu0 0.0
    %221 = vmatprep.mubr.f32.mxu0 0.0
    %222 = vmatmul.mubr.f32.gmra.mxu0 %v146
    %v223 = vpop.f32.mrf.mxu0
    %v224 = vadd.f32 %v127, %v223
    %v225 = vpop.f32.mrf.mxu0
    %226 = vmatprep.mubr.f32.mxu0 0.0
    %227 = vmatmul.mubr.f32.gmra.mxu0 %v149
    %v228 = vpop.f32.mrf.mxu0
    %v229 = vadd.f32 %v132, %v228
    %v230 = vpop.f32.mrf.mxu0
    %231 = vmatprep.mubr.f32.mxu0 0.0
    %232 = vmatmul.mubr.f32.gmra.mxu0 %v152
    %v233 = vpop.f32.mrf.mxu0
    %v234 = vadd.f32 %v137, %v233
    %v235 = vpop.f32.mrf.mxu0
    %236 = vmatprep.mubr.f32.mxu0 0.0
    %237 = vmatmul.mubr.f32.gmra.mxu0 %v155
    %v238 = vpop.f32.mrf.mxu0
    %v239 = vadd.f32 %v142, %v238
    %v240 = vpop.f32.mrf.mxu0
    %241 = vdwg.mxu0
    %s242 = sld [smem:[#allocation2]]
    %v243 = vld [vmem:[%s1] sm:$0xff]
    %v244 = vld [vmem:[%s1 + $0x8] sm:$0xff]
    %v245 = vld [vmem:[%s1 + $0x10] sm:$0xff]
    %v246 = vld [vmem:[%s1 + $0x18] sm:$0xff]
    %v247 = vstv %s242
    %v248 = vmul.f32 %v247, %v243
    %v249 = vmul.f32 %v247, %v244
    %v250 = vmul.f32 %v247, %v245
    %v251 = vmul.f32 %v247, %v246
    %s252 = sld [smem:[#allocation2 + $0x1]]
    %v253 = vstv %s252
    %v254 = vmul.f32 %v253, %v224
    %v255 = vmul.f32 %v253, %v229
    %v256 = vmul.f32 %v253, %v234
    %v257 = vmul.f32 %v253, %v239
    %v258 = vadd.f32 %v248, %v254
    %v259 = vadd.f32 %v249, %v255
    %v260 = vadd.f32 %v250, %v256
    %v261 = vadd.f32 %v251, %v257
    %262 = vst [vmem:[#allocation5] sm:$0xff] %v258
    %263 = vst [vmem:[#allocation5 + $0x8] sm:$0xff] %v259
    %264 = vst [vmem:[#allocation5 + $0x10] sm:$0xff] %v260
    %265 = vst [vmem:[#allocation5 + $0x18] sm:$0xff] %v261
    // Predicated region
    $region30: #{tpu_custom_call.1} parent=1 // pred_check
      _
    $region31: #{tpu_custom_call.1} parent=1 // pred_check_branch
      %267 = sbr.rel (0) target = $region33
    $region32: #{tpu_custom_call.1} parent=1 // pred_region
      %s269 = ssub.s32 512, 512
      %270 = vsyncadd [#allocation3], %s269
      %s271 = sshll.u32 [#allocation5], 4
      %s272 = int_to_ptr.vmem [resolvable:$true] %s271
      %277 = dma.vmem_to_hbm [thread:$0]  %s272, 512, %s6, [#allocation3], 128, 128, 8
    $region33: #{tpu_custom_call.1} parent=1 // pred_fallthru
      _
    // Predicated region
    $region34: #{tpu_custom_call.1} parent=1 // pred_check
      _
    $region35: #{tpu_custom_call.1} parent=1 // pred_check_branch
      %279 = sbr.rel (0) target = $region37
    $region36: #{tpu_custom_call.1} parent=1 // pred_region
      %280 = dma.done [#allocation3], 512
    $region37: #{tpu_custom_call.1} parent=1 // pred_fallthru
      _
    %281 = vsyncpa [#allocation3], 1
    %282 = vsyncpa [#allocation4], 1

</llo_original>
